<compile_context>
chip_gen: v7x
topology: tpu7x:2x2x1
jax: 0.10.0
libtpu: 0.0.40
codegen_flags: <defaults>
</compile_context>

<pallas_src>
import jax
import jax.numpy as jnp
import numpy as np
from jax.experimental import pallas as pl
from jax.experimental.pallas import tpu as pltpu

# bf16 operands for both MXU matmuls (accumulation stays f32). Set to
# jnp.float32 to get a bit-tighter match against an f32 reference.
MATMUL_DTYPE = jnp.bfloat16


def _inception_kernel(x_ref, w1_ref, b1_ref, w2_ref, b2_ref, out_ref):
    """x_ref: (bt, Cin, L) NCL tile.  out_ref: (bt, 128, L) NCL tile."""
    bt, cin, seq = x_ref.shape
    f32 = jnp.float32

    # Loop-invariant weight/bias loads hoisted out of the per-sequence loop.
    w1 = w1_ref[...]          # (128, 2*Cin)  bf16
    b1 = b1_ref[...]          # (128, 1)      f32
    w2 = w2_ref[...]          # (128, 320)    bf16
    b2 = b2_ref[...]          # (128, 1)      f32

    def shift(h, off, fill):
        # result[:, t] = h[:, t + off]; positions outside [0, L) take `fill`.
        # `off` is a static Python int, so this is cheap lane slicing/concat.
        pad = jnp.full((h.shape[0], abs(off)), fill, h.dtype)
        if off > 0:
            return jnp.concatenate([h[:, off:], pad], axis=1)
        return jnp.concatenate([pad, h[:, :off]], axis=1)

    @pl.loop(0, bt)
    def _(b):
        x = x_ref[b].astype(f32)                                  # (Cin, L)

        # Branch-4 max-pool (k=3, stride=1, pad=1): out-of-range neighbours
        # are -inf, i.e. they never win the max (matches PyTorch padding).
        pooled = jnp.maximum(x, jnp.maximum(shift(x, -1, -jnp.inf),
                                            shift(x, 1, -jnp.inf)))

        # Stage 1: all four 1x1 convolutions fused into one matmul.
        #   rows   0: 32  branch1 (pre-ReLU)     rows 32: 64  branch2 hidden
        #   rows  64: 96  branch3 hidden         rows 96:128  branch4 (pre-ReLU)
        xcat = jnp.concatenate([x, pooled], axis=0).astype(w1.dtype)   # (2Cin, L)
        h = jnp.dot(w1, xcat, preferred_element_type=f32) + b1         # (128, L)
        h2 = h[32:64, :]
        h3 = h[64:96, :]

        # Stage 2: stack the temporal taps along channels and finish every
        # branch (incl. the identity passthrough of branches 1/4) with one
        # (128, 320) @ (320, L) matmul + ReLU -> NCL tile stored directly.
        s = jnp.concatenate(
            [h[0:32, :],
             shift(h2, -1, 0.0), h2, shift(h2, 1, 0.0),
             shift(h3, -2, 0.0), shift(h3, -1, 0.0), h3,
             shift(h3, 1, 0.0), shift(h3, 2, 0.0),
             h[96:128, :]], axis=0).astype(w2.dtype)                   # (320, L)
        out = jnp.maximum(jnp.dot(w2, s, preferred_element_type=f32) + b2, 0.0)
        out_ref[b] = out.astype(out_ref.dtype)                         # (128, L)


def _prep_fused_weights(params, cin, dtype):
    """Fuse the 12 PyTorch conv params into two channel-first weight slabs."""
    (w1, b1, w2a, b2a, w2b, b2b, w3a, b3a, w3b, b3b, w4, b4) = params
    f32 = jnp.float32

    def pw(w):  # pointwise conv weight (32, Cin, 1) -> (Cin, 32)
        return jnp.transpose(w[:, :, 0]).astype(f32)

    z = jnp.zeros((cin, 32), f32)
    ws1 = jnp.concatenate([
        jnp.concatenate([pw(w1), pw(w2a), pw(w3a), z], axis=1),   # rows: x
        jnp.concatenate([z, z, z, pw(w4)], axis=1),               # rows: pooled x
    ], axis=0)                                                    # (2Cin, 128)
    bs1 = jnp.concatenate([b1, b2a, b3a, b4]).astype(f32).reshape(128, 1)

    # Temporal conv weights with taps stacked along the input-channel axis:
    # (O, I, K) -> (K, I, O) -> (K*I, O); row block k multiplies h[t + k - pad].
    w2b_s = jnp.transpose(w2b, (2, 1, 0)).reshape(3 * 32, 32).astype(f32)
    w3b_s = jnp.transpose(w3b, (2, 1, 0)).reshape(5 * 32, 32).astype(f32)
    eye = jnp.eye(32, dtype=f32)

    def place(block, col):  # place an (r, 32) block into output-column slot `col`
        r = block.shape[0]
        cols = [jnp.zeros((r, 32), f32)] * 4
        cols[col] = block
        return jnp.concatenate(cols, axis=1)

    ws2 = jnp.concatenate([place(eye, 0), place(w2b_s, 1),
                           place(w3b_s, 2), place(eye, 3)], axis=0)    # (320, 128)
    bs2 = jnp.concatenate([jnp.zeros((32,), f32), b2b.astype(f32),
                           b3b.astype(f32), jnp.zeros((32,), f32)]).reshape(128, 1)

    # Channels-first ("transposed") weights so the kernel's matmuls emit
    # (C_out, T) tiles directly -> NCL store with no transposes anywhere.
    return (jnp.transpose(ws1).astype(dtype), bs1,
            jnp.transpose(ws2).astype(dtype), bs2)


def _pick_batch_tile(n, seq, target_rows=1024):
    # Pack several sequences per grid step (bigger DMAs, amortized per-step
    # overhead) but (a) keep the grid >= 2 whenever N >= 2 so both v7x
    # TensorCores get work, and (b) keep the block comfortably inside VMEM.
    # Only exact divisors of N are used (correct for any N, just less packed
    # for prime batch sizes).
    cap = max(1, n // 2)
    rows_cap = max(1, target_rows // max(seq, 1))
    best = 1
    for d in range(1, n + 1):
        if n % d == 0 and d <= cap and d <= rows_cap:
            best = d
    return best


@jax.jit
def inception1d_pallas(x_ncl, params):
    """x_ncl: (N, C_in, L) float32 -> (N, 128, L) float32 (PyTorch NCL)."""
    n, cin, seq = x_ncl.shape
    w1, b1, w2, b2 = _prep_fused_weights(params, cin, MATMUL_DTYPE)

    bt = _pick_batch_tile(n, seq)
    grid = (n // bt,)

    return pl.pallas_call(
        _inception_kernel,
        out_shape=jax.ShapeDtypeStruct((n, 128, seq), jnp.float32),
        grid=grid,
        in_specs=[
            pl.BlockSpec((bt, cin, seq), lambda i: (i, 0, 0)),     # x (NCL tile)
            pl.BlockSpec((128, 2 * cin), lambda i: (0, 0)),        # fused 1x1 W^T
            pl.BlockSpec((128, 1), lambda i: (0, 0)),              # fused 1x1 bias
            pl.BlockSpec((128, 320), lambda i: (0, 0)),            # fused stage-2 W^T
            pl.BlockSpec((128, 1), lambda i: (0, 0)),              # fused stage-2 bias
        ],
        out_specs=pl.BlockSpec((bt, 128, seq), lambda i: (i, 0, 0)),
        compiler_params=pltpu.CompilerParams(
            dimension_semantics=("parallel",)),
    )(x_ncl.astype(jnp.float32), w1, b1, w2, b2)


def _reference_forward(x, params):
    """Pure-JAX f32 reference matching the PyTorch module (NCL layout)."""
    (w1, b1, w2a, b2a, w2b, b2b, w3a, b3a, w3b, b3b, w4, b4) = params

    def conv(inp, w, b, pad):
        y = jax.lax.conv_general_dilated(
            inp, w, window_strides=(1,), padding=[(pad, pad)],
            dimension_numbers=("NCH", "OIH", "NCH"))
        return y + b[None, :, None]

    relu = lambda a: jnp.maximum(a, 0.0)
    seq = x.shape[-1]

    o1 = relu(conv(x, w1, b1, 0))
    o2 = relu(conv(conv(x, w2a, b2a, 0), w2b, b2b, 1))
    o3 = relu(conv(conv(x, w3a, b3a, 0), w3b, b3b, 2))
    xp = jnp.pad(x, ((0, 0), (0, 0), (1, 1)), constant_values=-jnp.inf)
    pooled = jnp.max(jnp.stack([xp[:, :, k:k + seq] for k in range(3)], 0), 0)
    o4 = relu(conv(pooled, w4, b4, 0))
    return jnp.concatenate([o1, o2, o3, o4], axis=1)


def _init_params(key, in_channels):
    ks = jax.random.split(key, 12)
    n = lambda k, s: (0.1 * jax.random.normal(k, s)).astype(jnp.float32)
    return (
        n(ks[0], (32, in_channels, 1)), n(ks[1], (32,)),     # branch1
        n(ks[2], (32, in_channels, 1)), n(ks[3], (32,)),     # branch2 1x1
        n(ks[4], (32, 32, 3)),          n(ks[5], (32,)),     # branch2 k=3
        n(ks[6], (32, in_channels, 1)), n(ks[7], (32,)),     # branch3 1x1
        n(ks[8], (32, 32, 5)),          n(ks[9], (32,)),     # branch3 k=5
        n(ks[10], (32, in_channels, 1)), n(ks[11], (32,)),   # branch4 1x1
    )


if __name__ == "__main__":
    N, C_IN, L = 2, 4, 16
    key = jax.random.PRNGKey(0)
    kx, kp = jax.random.split(key)
    x = jax.random.normal(kx, (N, C_IN, L), dtype=jnp.float32)
    params = _init_params(kp, C_IN)

    out = jax.block_until_ready(inception1d_pallas(x, params))
    assert out.shape == (N, 128, L), out.shape

    ref = jax.block_until_ready(_reference_forward(x, params))
    # bf16 MXU operands (f32 accumulation) -> compare with a bf16-appropriate
    # tolerance against the f32 reference.
    np.testing.assert_allclose(np.asarray(out), np.asarray(ref),
                               rtol=2e-2, atol=2e-2)
    print("KERNEL_OK")
</pallas_src>

<mosaic_0001>
module attributes {stable_mosaic.version = 11 : i64} {
  func.func @_inception_kernel(%arg0: i32, %arg1: memref<1x4x16xf32, #tpu.memory_space<vmem>>, %arg2: memref<128x8xbf16, #tpu.memory_space<vmem>>, %arg3: memref<128x1xf32, #tpu.memory_space<vmem>>, %arg4: memref<128x320xbf16, #tpu.memory_space<vmem>>, %arg5: memref<128x1xf32, #tpu.memory_space<vmem>>, %arg6: memref<1x128x16xf32, #tpu.memory_space<vmem>>) attributes {dimension_semantics = [#tpu.dimension_semantics<parallel>], iteration_bounds = array<i64: 2>, scalar_prefetch = 0 : i64, scratch_operands = 0 : i64, tpu.core_type = #tpu.core_type<tc>, window_params = [{transform_indices = @transform_0, window_bounds = array<i64: 1, 4, 16>}, {pipeline_mode = #tpu.pipeline_mode<synchronous>, transform_indices = @transform_1, window_bounds = array<i64: 128, 8>}, {pipeline_mode = #tpu.pipeline_mode<synchronous>, transform_indices = @transform_2, window_bounds = array<i64: 128, 1>}, {pipeline_mode = #tpu.pipeline_mode<synchronous>, transform_indices = @transform_3, window_bounds = array<i64: 128, 320>}, {pipeline_mode = #tpu.pipeline_mode<synchronous>, transform_indices = @transform_4, window_bounds = array<i64: 128, 1>}, {transform_indices = @transform_5, window_bounds = array<i64: 1, 128, 16>}]} {
    %c0 = arith.constant 0 : index
    %c0_0 = arith.constant 0 : index
    %0 = vector.load %arg2[%c0, %c0_0] : memref<128x8xbf16, #tpu.memory_space<vmem>>, vector<128x8xbf16>
    %c0_1 = arith.constant 0 : index
    %c0_2 = arith.constant 0 : index
    %1 = vector.load %arg3[%c0_1, %c0_2] : memref<128x1xf32, #tpu.memory_space<vmem>>, vector<128x1xf32>
    %c0_3 = arith.constant 0 : index
    %c0_4 = arith.constant 0 : index
    %2 = vector.load %arg4[%c0_3, %c0_4] : memref<128x320xbf16, #tpu.memory_space<vmem>>, vector<128x320xbf16>
    %c0_5 = arith.constant 0 : index
    %c0_6 = arith.constant 0 : index
    %3 = vector.load %arg5[%c0_5, %c0_6] : memref<128x1xf32, #tpu.memory_space<vmem>>, vector<128x1xf32>
    %c0_i32 = arith.constant 0 : i32
    %c1_i32 = arith.constant 1 : i32
    %4 = arith.muli %c0_i32, %c1_i32 : i32
    %c0_i32_7 = arith.constant 0 : i32
    %5 = arith.addi %c0_i32_7, %4 : i32
    %6 = arith.index_cast %5 : i32 to index
    %c0_8 = arith.constant 0 : index
    %c0_9 = arith.constant 0 : index
    %7 = vector.load %arg1[%6, %c0_8, %c0_9] : memref<1x4x16xf32, #tpu.memory_space<vmem>>, vector<1x4x16xf32>
    %8 = vector.shape_cast %7 : vector<1x4x16xf32> to vector<4x16xf32>
    %cst = arith.constant 0xFF800000 : f32
    %9 = vector.broadcast %cst : f32 to vector<4x1xf32>
    %10 = vector.extract_strided_slice %8 {offsets = [0, 0], sizes = [4, 15], strides = [1, 1]} : vector<4x16xf32> to vector<4x15xf32>
    %11 = tpu.concatenate %9, %10 in 1 : vector<4x1xf32>, vector<4x15xf32> -> vector<4x16xf32>
    %cst_10 = arith.constant 0xFF800000 : f32
    %12 = vector.broadcast %cst_10 : f32 to vector<4x1xf32>
    %13 = vector.extract_strided_slice %8 {offsets = [0, 1], sizes = [4, 15], strides = [1, 1]} : vector<4x16xf32> to vector<4x15xf32>
    %14 = tpu.concatenate %13, %12 in 1 : vector<4x15xf32>, vector<4x1xf32> -> vector<4x16xf32>
    %15 = arith.maximumf %11, %14 : vector<4x16xf32>
    %16 = arith.maximumf %8, %15 : vector<4x16xf32>
    %17 = tpu.concatenate %8, %16 in 0 : vector<4x16xf32>, vector<4x16xf32> -> vector<8x16xf32>
    %18 = arith.truncf %17 : vector<8x16xf32> to vector<8x16xbf16>
    %cst_11 = arith.constant dense<0.000000e+00> : vector<128x16xf32>
    %19 = tpu.matmul %0, %18, %cst_11 {dimension_numbers = #tpu.dot_dimension_numbers<[1], [0], [0], [1], [0, 0, 1, 1], [], []>} : vector<128x8xbf16>, vector<8x16xbf16>, vector<128x16xf32> -> vector<128x16xf32>
    %20 = vector.broadcast %1 : vector<128x1xf32> to vector<128x16xf32>
    %21 = arith.addf %19, %20 : vector<128x16xf32>
    %22 = vector.extract_strided_slice %21 {offsets = [32, 0], sizes = [32, 16], strides = [1, 1]} : vector<128x16xf32> to vector<32x16xf32>
    %23 = vector.extract_strided_slice %21 {offsets = [64, 0], sizes = [32, 16], strides = [1, 1]} : vector<128x16xf32> to vector<32x16xf32>
    %24 = vector.extract_strided_slice %21 {offsets = [0, 0], sizes = [32, 16], strides = [1, 1]} : vector<128x16xf32> to vector<32x16xf32>
    %cst_12 = arith.constant 0.000000e+00 : f32
    %25 = vector.broadcast %cst_12 : f32 to vector<32x1xf32>
    %26 = vector.extract_strided_slice %22 {offsets = [0, 0], sizes = [32, 15], strides = [1, 1]} : vector<32x16xf32> to vector<32x15xf32>
    %27 = tpu.concatenate %25, %26 in 1 : vector<32x1xf32>, vector<32x15xf32> -> vector<32x16xf32>
    %cst_13 = arith.constant 0.000000e+00 : f32
    %28 = vector.broadcast %cst_13 : f32 to vector<32x1xf32>
    %29 = vector.extract_strided_slice %22 {offsets = [0, 1], sizes = [32, 15], strides = [1, 1]} : vector<32x16xf32> to vector<32x15xf32>
    %30 = tpu.concatenate %29, %28 in 1 : vector<32x15xf32>, vector<32x1xf32> -> vector<32x16xf32>
    %cst_14 = arith.constant 0.000000e+00 : f32
    %31 = vector.broadcast %cst_14 : f32 to vector<32x2xf32>
    %32 = vector.extract_strided_slice %23 {offsets = [0, 0], sizes = [32, 14], strides = [1, 1]} : vector<32x16xf32> to vector<32x14xf32>
    %33 = tpu.concatenate %31, %32 in 1 : vector<32x2xf32>, vector<32x14xf32> -> vector<32x16xf32>
    %cst_15 = arith.constant 0.000000e+00 : f32
    %34 = vector.broadcast %cst_15 : f32 to vector<32x1xf32>
    %35 = vector.extract_strided_slice %23 {offsets = [0, 0], sizes = [32, 15], strides = [1, 1]} : vector<32x16xf32> to vector<32x15xf32>
    %36 = tpu.concatenate %34, %35 in 1 : vector<32x1xf32>, vector<32x15xf32> -> vector<32x16xf32>
    %cst_16 = arith.constant 0.000000e+00 : f32
    %37 = vector.broadcast %cst_16 : f32 to vector<32x1xf32>
    %38 = vector.extract_strided_slice %23 {offsets = [0, 1], sizes = [32, 15], strides = [1, 1]} : vector<32x16xf32> to vector<32x15xf32>
    %39 = tpu.concatenate %38, %37 in 1 : vector<32x15xf32>, vector<32x1xf32> -> vector<32x16xf32>
    %cst_17 = arith.constant 0.000000e+00 : f32
    %40 = vector.broadcast %cst_17 : f32 to vector<32x2xf32>
    %41 = vector.extract_strided_slice %23 {offsets = [0, 2], sizes = [32, 14], strides = [1, 1]} : vector<32x16xf32> to vector<32x14xf32>
    %42 = tpu.concatenate %41, %40 in 1 : vector<32x14xf32>, vector<32x2xf32> -> vector<32x16xf32>
    %43 = vector.extract_strided_slice %21 {offsets = [96, 0], sizes = [32, 16], strides = [1, 1]} : vector<128x16xf32> to vector<32x16xf32>
    %44 = tpu.concatenate %24, %27, %22, %30, %33, %36, %23, %39, %42, %43 in 0 : vector<32x16xf32>, vector<32x16xf32>, vector<32x16xf32>, vector<32x16xf32>, vector<32x16xf32>, vector<32x16xf32>, vector<32x16xf32>, vector<32x16xf32>, vector<32x16xf32>, vector<32x16xf32> -> vector<320x16xf32>
    %45 = arith.truncf %44 : vector<320x16xf32> to vector<320x16xbf16>
    %cst_18 = arith.constant dense<0.000000e+00> : vector<128x16xf32>
    %46 = tpu.matmul %2, %45, %cst_18 {dimension_numbers = #tpu.dot_dimension_numbers<[1], [0], [0], [1], [0, 0, 1, 1], [], []>} : vector<128x320xbf16>, vector<320x16xbf16>, vector<128x16xf32> -> vector<128x16xf32>
    %47 = vector.broadcast %3 : vector<128x1xf32> to vector<128x16xf32>
    %48 = arith.addf %46, %47 : vector<128x16xf32>
    %cst_19 = arith.constant 0.000000e+00 : f32
    %49 = vector.broadcast %cst_19 : f32 to vector<128x16xf32>
    %50 = arith.maximumf %48, %49 : vector<128x16xf32>
    %51 = arith.index_cast %5 : i32 to index
    %c0_20 = arith.constant 0 : index
    %c0_21 = arith.constant 0 : index
    %52 = vector.load %arg6[%51, %c0_20, %c0_21] : memref<1x128x16xf32, #tpu.memory_space<vmem>>, vector<1x128x16xf32>
    %53 = vector.shape_cast %52 : vector<1x128x16xf32> to vector<128x16xf32>
    %54 = vector.shape_cast %50 : vector<128x16xf32> to vector<1x128x16xf32>
    tpu.vector_store %arg6[%51, %c0_20, %c0_21], %54 {strides = array<i32>} : memref<1x128x16xf32, #tpu.memory_space<vmem>>, vector<1x128x16xf32>,
    %c1_i32_22 = arith.constant 1 : i32
    return
  }
  func.func @transform_0(%arg0: i32) -> (i32, i32, i32) {
    %c0_i32 = arith.constant 0 : i32
    %c0_i32_0 = arith.constant 0 : i32
    %c0_i32_1 = arith.constant 0 : i32
    return %arg0, %c0_i32, %c0_i32_0 : i32, i32, i32
  }
  func.func @transform_1(%arg0: i32) -> (i32, i32) {
    %c0_i32 = arith.constant 0 : i32
    %c0_i32_0 = arith.constant 0 : i32
    %c0_i32_1 = arith.constant 0 : i32
    return %c0_i32, %c0_i32_0 : i32, i32
  }
  func.func @transform_2(%arg0: i32) -> (i32, i32) {
    %c0_i32 = arith.constant 0 : i32
    %c0_i32_0 = arith.constant 0 : i32
    %c0_i32_1 = arith.constant 0 : i32
    return %c0_i32, %c0_i32_0 : i32, i32
  }
  func.func @transform_3(%arg0: i32) -> (i32, i32) {
    %c0_i32 = arith.constant 0 : i32
    %c0_i32_0 = arith.constant 0 : i32
    %c0_i32_1 = arith.constant 0 : i32
    return %c0_i32, %c0_i32_0 : i32, i32
  }
  func.func @transform_4(%arg0: i32) -> (i32, i32) {
    %c0_i32 = arith.constant 0 : i32
    %c0_i32_0 = arith.constant 0 : i32
    %c0_i32_1 = arith.constant 0 : i32
    return %c0_i32, %c0_i32_0 : i32, i32
  }
  func.func @transform_5(%arg0: i32) -> (i32, i32, i32) {
    %c0_i32 = arith.constant 0 : i32
    %c0_i32_0 = arith.constant 0 : i32
    %c0_i32_1 = arith.constant 0 : i32
    return %arg0, %c0_i32, %c0_i32_0 : i32, i32, i32
  }
}

</mosaic_0001>

<llo_original>
// kernel: inception1d_pallas.1
$region0: #{inception1d_pallas.1}
  #allocation0 [shape = 'u32[]', space=smem, size = 0x4, offset = 0x4, fixed_abs, tag = 'smem constant byte address 0x4 - core index']
  #allocation1 [shape = 'u32[144,128]{1,0:T(1,128)}', space=vmem, size = 0x12000, scoped, tag = 'internal scratch']
  %s0 = inlined_call_operand.vmem [shape: f32[2,4,16], index: 0, kind: input, shape index: {}]
  %s1 = inlined_call_operand.vmem [shape: bf16[128,8], index: 1, kind: input, shape index: {}]
  %s2 = inlined_call_operand.vmem [shape: f32[128,1], index: 2, kind: input, shape index: {}]
  %s3 = inlined_call_operand.vmem [shape: bf16[128,320], index: 3, kind: input, shape index: {}]
  %s4 = inlined_call_operand.vmem [shape: f32[128,1], index: 4, kind: input, shape index: {}]
  %s5 = inlined_call_operand.vmem [shape: f32[2,128,16], index: 5, kind: output, shape index: {}]
  %s6 = sld [smem:[#allocation0]]
  $region53: #{inception1d_pallas.1} parent=0
    _
  %s8 = ssub.s32 1, %s6
  %s9 = scalar_select 0, %s8, %s6
  loop: start=0, step=1, limit=4
  $region2: #{inception1d_pallas.1} parent=0 // loop_pre_header
    _
  $region3: #{inception1d_pallas.1} parent=0 // loop_header
    %s11 = sphi 0, %s15
    %p12 = scmp.ge.s32.totalorder %s11, 4
    %s21 = sphi 0, %s23
    %s24 = sphi 0, %s21
    %s25 = sphi 0, %s24
    %s41 = sphi 0, %s25
    %s45 = sphi 0, %s45
    %s47 = sphi 0, %s45
    %s48 = sphi 0, %s47
    %s62 = sphi 0, %s48
    %s66 = sphi 0, %s66
    %s68 = sphi 0, %s66
    %s69 = sphi 0, %s68
    %s83 = sphi 0, %s69
    %s87 = sphi 0, %s87
    %s89 = sphi 0, %s87
    %s90 = sphi 0, %s89
    %s104 = sphi 0, %s90
    %s108 = sphi 0, %s108
    %s110 = sphi 0, %s108
    %s111 = sphi 0, %s110
    %s125 = sphi 0, %s111
    %s131 = sphi 0, %s133
    %s134 = sphi 0, %s131
    %s135 = sphi 0, %s134
    %s151 = sphi 0, %s135
  $region4: #{inception1d_pallas.1} parent=0 // loop_header_branch
    %14 = sbr.rel (%p12) target = $region8
  $region5: #{inception1d_pallas.1} parent=0 // loop_body
    %s16 = ssub.s32 %s11, 1
    %s17 = ssub.s32 %s11, 2
    %s18 = sadd.s32 %s11, 1
    %s19 = ssub.s32 %s11, %s18
    %p20 = scmp.eq.s32.totalorder %s19, 0
    %s22 = sadd.s32 %s21, 1
    %s23 = scalar_select %p20, %s21, %s22
    %p26 = pneg %p20
    %p27 = scmp.eq.s32.totalorder %s11, 1
    %p28 = por %p26, %p27
    %p29 = scmp.ne.s32.totalorder %s21, %s24
    %p30 = scmp.eq.s32.totalorder %s11, 0
    %p31 = por %p29, %p30
    %p32 = scmp.ne.s32.totalorder %s21, %s24
    %p33 = scmp.eq.s32.totalorder %s16, 1
    %p34 = por %p32, %p33
    %p35 = scmp.ne.s32.totalorder %s24, %s25
    %p36 = scmp.eq.s32.totalorder %s16, 0
    %p37 = por %p35, %p36
    %p38 = scmp.ne.s32.totalorder %s24, %s25
    %p39 = scmp.eq.s32.totalorder %s17, 1
    %p40 = por %p38, %p39
    %p42 = scmp.ne.s32.totalorder %s25, %s41
    %p43 = scmp.eq.s32.totalorder %s17, 0
    %p44 = por %p42, %p43
    %s46 = sadd.s32 %s45, 1
    %p49 = scmp.eq.s32.totalorder %s11, 1
    %p50 = scmp.ne.s32.totalorder %s45, %s47
    %p51 = scmp.eq.s32.totalorder %s11, 0
    %p52 = por %p50, %p51
    %p53 = scmp.ne.s32.totalorder %s45, %s47
    %p54 = scmp.eq.s32.totalorder %s16, 1
    %p55 = por %p53, %p54
    %p56 = scmp.ne.s32.totalorder %s47, %s48
    %p57 = scmp.eq.s32.totalorder %s16, 0
    %p58 = por %p56, %p57
    %p59 = scmp.ne.s32.totalorder %s47, %s48
    %p60 = scmp.eq.s32.totalorder %s17, 1
    %p61 = por %p59, %p60
    %p63 = scmp.ne.s32.totalorder %s48, %s62
    %p64 = scmp.eq.s32.totalorder %s17, 0
    %p65 = por %p63, %p64
    %s67 = sadd.s32 %s66, 1
    %p70 = scmp.eq.s32.totalorder %s11, 1
    %p71 = scmp.ne.s32.totalorder %s66, %s68
    %p72 = scmp.eq.s32.totalorder %s11, 0
    %p73 = por %p71, %p72
    %p74 = scmp.ne.s32.totalorder %s66, %s68
    %p75 = scmp.eq.s32.totalorder %s16, 1
    %p76 = por %p74, %p75
    %p77 = scmp.ne.s32.totalorder %s68, %s69
    %p78 = scmp.eq.s32.totalorder %s16, 0
    %p79 = por %p77, %p78
    %p80 = scmp.ne.s32.totalorder %s68, %s69
    %p81 = scmp.eq.s32.totalorder %s17, 1
    %p82 = por %p80, %p81
    %p84 = scmp.ne.s32.totalorder %s69, %s83
    %p85 = scmp.eq.s32.totalorder %s17, 0
    %p86 = por %p84, %p85
    %s88 = sadd.s32 %s87, 1
    %p91 = scmp.eq.s32.totalorder %s11, 1
    %p92 = scmp.ne.s32.totalorder %s87, %s89
    %p93 = scmp.eq.s32.totalorder %s11, 0
    %p94 = por %p92, %p93
    %p95 = scmp.ne.s32.totalorder %s87, %s89
    %p96 = scmp.eq.s32.totalorder %s16, 1
    %p97 = por %p95, %p96
    %p98 = scmp.ne.s32.totalorder %s89, %s90
    %p99 = scmp.eq.s32.totalorder %s16, 0
    %p100 = por %p98, %p99
    %p101 = scmp.ne.s32.totalorder %s89, %s90
    %p102 = scmp.eq.s32.totalorder %s17, 1
    %p103 = por %p101, %p102
    %p105 = scmp.ne.s32.totalorder %s90, %s104
    %p106 = scmp.eq.s32.totalorder %s17, 0
    %p107 = por %p105, %p106
    %s109 = sadd.s32 %s108, 1
    %p112 = scmp.eq.s32.totalorder %s11, 1
    %p113 = scmp.ne.s32.totalorder %s108, %s110
    %p114 = scmp.eq.s32.totalorder %s11, 0
    %p115 = por %p113, %p114
    %p116 = scmp.ne.s32.totalorder %s108, %s110
    %p117 = scmp.eq.s32.totalorder %s16, 1
    %p118 = por %p116, %p117
    %p119 = scmp.ne.s32.totalorder %s110, %s111
    %p120 = scmp.eq.s32.totalorder %s16, 0
    %p121 = por %p119, %p120
    %p122 = scmp.ne.s32.totalorder %s110, %s111
    %p123 = scmp.eq.s32.totalorder %s17, 1
    %p124 = por %p122, %p123
    %p126 = scmp.ne.s32.totalorder %s111, %s125
    %p127 = scmp.eq.s32.totalorder %s17, 0
    %p128 = por %p126, %p127
    %s129 = ssub.s32 %s11, %s18
    %p130 = scmp.eq.s32.totalorder %s129, 0
    %s132 = sadd.s32 %s131, 1
    %s133 = scalar_select %p130, %s131, %s132
    %p136 = pneg %p130
    %p137 = scmp.eq.s32.totalorder %s11, 1
    %p138 = por %p136, %p137
    %p139 = scmp.ne.s32.totalorder %s131, %s134
    %p140 = scmp.eq.s32.totalorder %s11, 0
    %p141 = por %p139, %p140
    %p142 = scmp.ne.s32.totalorder %s131, %s134
    %p143 = scmp.eq.s32.totalorder %s16, 1
    %p144 = por %p142, %p143
    %p145 = scmp.ne.s32.totalorder %s134, %s135
    %p146 = scmp.eq.s32.totalorder %s16, 0
    %p147 = por %p145, %p146
    %p148 = scmp.ne.s32.totalorder %s134, %s135
    %p149 = scmp.eq.s32.totalorder %s17, 1
    %p150 = por %p148, %p149
    %p152 = scmp.ne.s32.totalorder %s135, %s151
    %p153 = scmp.eq.s32.totalorder %s17, 0
    %p154 = por %p152, %p153
    %p155 = scmp.le.s32.totalorder 1, %s11
    %p156 = scmp.lt.s32.totalorder %s11, 3
    %p157 = pnand %p155, %p156
    %p158 = pneg %p157
    // Predicated region
    $region9: #{inception1d_pallas.1} parent=5 // pred_check
      _
    $region10: #{inception1d_pallas.1} parent=5 // pred_check_branch
      %160 = sbr.rel (%p157) target = $region12
    $region11: #{inception1d_pallas.1} parent=5 // pred_region
      %s161 = ssub.s32 %s11, 1
      // Predicated region
      $region13: #{inception1d_pallas.1} parent=11 // pred_check
        %p162 = pneg %p58
      $region14: #{inception1d_pallas.1} parent=11 // pred_check_branch
        %164 = sbr.rel (%p162) target = $region16
      $region15: #{inception1d_pallas.1} parent=11 // pred_region
        _
      $region16: #{inception1d_pallas.1} parent=11 // pred_fallthru
        _
      // Predicated region
      $region17: #{inception1d_pallas.1} parent=11 // pred_check
        %p165 = pneg %p79
      $region18: #{inception1d_pallas.1} parent=11 // pred_check_branch
        %167 = sbr.rel (%p165) target = $region20
      $region19: #{inception1d_pallas.1} parent=11 // pred_region
        _
      $region20: #{inception1d_pallas.1} parent=11 // pred_fallthru
        _
      // Predicated region
      $region21: #{inception1d_pallas.1} parent=11 // pred_check
        %p168 = pneg %p100
      $region22: #{inception1d_pallas.1} parent=11 // pred_check_branch
        %170 = sbr.rel (%p168) target = $region24
      $region23: #{inception1d_pallas.1} parent=11 // pred_region
        _
      $region24: #{inception1d_pallas.1} parent=11 // pred_fallthru
        _
      // Predicated region
      $region25: #{inception1d_pallas.1} parent=11 // pred_check
        %p171 = pneg %p121
      $region26: #{inception1d_pallas.1} parent=11 // pred_check_branch
        %173 = sbr.rel (%p171) target = $region28
      $region27: #{inception1d_pallas.1} parent=11 // pred_region
        _
      $region28: #{inception1d_pallas.1} parent=11 // pred_fallthru
        _
    $region12: #{inception1d_pallas.1} parent=5 // pred_fallthru
      _
    %p174 = scmp.lt.s32.totalorder %s11, 2
    // Predicated region
    $region29: #{inception1d_pallas.1} parent=5 // pred_check
      %p175 = pneg %p174
    $region30: #{inception1d_pallas.1} parent=5 // pred_check_branch
      %177 = sbr.rel (%p175) target = $region32
    $region31: #{inception1d_pallas.1} parent=5 // pred_region
      // Predicated region
      $region33: #{inception1d_pallas.1} parent=31 // pred_check
        %p178 = pneg %p31
      $region34: #{inception1d_pallas.1} parent=31 // pred_check_branch
        %180 = sbr.rel (%p178) target = $region36
      $region35: #{inception1d_pallas.1} parent=31 // pred_region
        %p181 = scmp.lt.s32.totalorder %s11, 1
        %s182 = scalar_select %p181, %s11, 1
        %s183 = smul.addr %s182, 4
        %s184 = scalar_lea.vmem %s0, %s183
      $region36: #{inception1d_pallas.1} parent=31 // pred_fallthru
        _
    $region32: #{inception1d_pallas.1} parent=5 // pred_fallthru
      _
    %p185 = scmp.le.s32.totalorder 1, %s11
    %p186 = scmp.lt.s32.totalorder %s11, 3
    %p187 = pnand %p185, %p186
    %p188 = pneg %p187
    // Predicated region
    $region37: #{inception1d_pallas.1} parent=5 // pred_check
      _
    $region38: #{inception1d_pallas.1} parent=5 // pred_check_branch
      %190 = sbr.rel (%p187) target = $region40
    $region39: #{inception1d_pallas.1} parent=5 // pred_region
      %s191 = ssub.s32 %s11, 1
      %p192 = scmp.lt.s32.totalorder %s16, 1
      %s193 = scalar_select %p192, %s16, 1
      %s194 = smul.addr %s193, 4
      %s195 = scalar_lea.vmem %s0, %s194
      %p196 = pneg %p37
      %p197 = pneg %p34
      %p198 = pneg %p58
      %p199 = pneg %p55
      %p200 = pneg %p79
      %p201 = pneg %p76
      %p202 = pneg %p100
      %p203 = pneg %p97
      %p204 = pneg %p121
      %p205 = pneg %p118
      %p206 = pneg %p147
      %p207 = pneg %p144
      %p208 = scmp.lt.s32.totalorder %s16, 1
      %s209 = scalar_select %p208, %s16, 1
      %s210 = smul.addr %s209, 16
      %s211 = smul.addr %s210, 8
      %s212 = scalar_lea.vmem %s5, %s211
      %p213 = scmp.lt.s32.totalorder %s16, 1
      %s214 = scalar_select %p213, %s16, 1
      %s215 = smul.addr %s214, 4
      %s216 = scalar_lea.vmem %s0, %s215
      %p217 = scmp.lt.s32.totalorder %s16, 1
      %s218 = scalar_select %p217, %s16, 1
      %s219 = smul.addr %s218, 16
      %s220 = smul.addr %s219, 8
      %s221 = scalar_lea.vmem %s5, %s220
      %v223 = vld [vmem:[%s1] sm:$0xf]
      %v224 = vld [vmem:[%s1 + $0x4] sm:$0xf]
      %v225 = vld [vmem:[%s1 + $0x8] sm:$0xf]
      %v226 = vld [vmem:[%s1 + $0xc] sm:$0xf]
      %v227 = vld [vmem:[%s1 + $0x10] sm:$0xf]
      %v228 = vld [vmem:[%s1 + $0x14] sm:$0xf]
      %v229 = vld [vmem:[%s1 + $0x18] sm:$0xf]
      %v230 = vld [vmem:[%s1 + $0x1c] sm:$0xf]
      %v231 = vld [vmem:[%s1 + $0x20] sm:$0xf]
      %v232 = vld [vmem:[%s1 + $0x24] sm:$0xf]
      %v233 = vld [vmem:[%s1 + $0x28] sm:$0xf]
      %v234 = vld [vmem:[%s1 + $0x2c] sm:$0xf]
      %v235 = vld [vmem:[%s1 + $0x30] sm:$0xf]
      %v236 = vld [vmem:[%s1 + $0x34] sm:$0xf]
      %v237 = vld [vmem:[%s1 + $0x38] sm:$0xf]
      %v238 = vld [vmem:[%s1 + $0x3c] sm:$0xf]
      %v239 = vld [vmem:[%s2] sm:$0xff]
      %v240 = vld [vmem:[%s2 + $0x8] sm:$0xff]
      %v241 = vld [vmem:[%s2 + $0x10] sm:$0xff]
      %v242 = vld [vmem:[%s2 + $0x18] sm:$0xff]
      %v243 = vld [vmem:[%s2 + $0x20] sm:$0xff]
      %v244 = vld [vmem:[%s2 + $0x28] sm:$0xff]
      %v245 = vld [vmem:[%s2 + $0x30] sm:$0xff]
      %v246 = vld [vmem:[%s2 + $0x38] sm:$0xff]
      %v247 = vld [vmem:[%s2 + $0x40] sm:$0xff]
      %v248 = vld [vmem:[%s2 + $0x48] sm:$0xff]
      %v249 = vld [vmem:[%s2 + $0x50] sm:$0xff]
      %v250 = vld [vmem:[%s2 + $0x58] sm:$0xff]
      %v251 = vld [vmem:[%s2 + $0x60] sm:$0xff]
      %v252 = vld [vmem:[%s2 + $0x68] sm:$0xff]
      %v253 = vld [vmem:[%s2 + $0x70] sm:$0xff]
      %v254 = vld [vmem:[%s2 + $0x78] sm:$0xff]
      %v255 = vld [vmem:[%s3] sm:$0xff]
      %v256 = vld [vmem:[%s3 + $0x8] sm:$0xf]
      %v257 = vld [vmem:[%s3 + $0xc] sm:$0xff]
      %v258 = vld [vmem:[%s3 + $0x14] sm:$0xf]
      %v259 = vld [vmem:[%s3 + $0x18] sm:$0xff]
      %v260 = vld [vmem:[%s3 + $0x20] sm:$0xf]
      %v261 = vld [vmem:[%s3 + $0x24] sm:$0xff]
      %v262 = vld [vmem:[%s3 + $0x2c] sm:$0xf]
      %v263 = vld [vmem:[%s3 + $0x30] sm:$0xff]
      %v264 = vld [vmem:[%s3 + $0x38] sm:$0xf]
      %v265 = vld [vmem:[%s3 + $0x3c] sm:$0xff]
      %v266 = vld [vmem:[%s3 + $0x44] sm:$0xf]
      %v267 = vld [vmem:[%s3 + $0x48] sm:$0xff]
      %v268 = vld [vmem:[%s3 + $0x50] sm:$0xf]
      %v269 = vld [vmem:[%s3 + $0x54] sm:$0xff]
      %v270 = vld [vmem:[%s3 + $0x5c] sm:$0xf]
      %v271 = vld [vmem:[%s3 + $0x60] sm:$0xff]
      %v272 = vld [vmem:[%s3 + $0x68] sm:$0xf]
      %v273 = vld [vmem:[%s3 + $0x6c] sm:$0xff]
      %v274 = vld [vmem:[%s3 + $0x74] sm:$0xf]
      %v275 = vld [vmem:[%s3 + $0x78] sm:$0xff]
      %v276 = vld [vmem:[%s3 + $0x80] sm:$0xf]
      %v277 = vld [vmem:[%s3 + $0x84] sm:$0xff]
      %v278 = vld [vmem:[%s3 + $0x8c] sm:$0xf]
      %v279 = vld [vmem:[%s3 + $0x90] sm:$0xff]
      %v280 = vld [vmem:[%s3 + $0x98] sm:$0xf]
      %v281 = vld [vmem:[%s3 + $0x9c] sm:$0xff]
      %v282 = vld [vmem:[%s3 + $0xa4] sm:$0xf]
      %v283 = vld [vmem:[%s3 + $0xa8] sm:$0xff]
      %v284 = vld [vmem:[%s3 + $0xb0] sm:$0xf]
      %v285 = vld [vmem:[%s3 + $0xb4] sm:$0xff]
      %v286 = vld [vmem:[%s3 + $0xbc] sm:$0xf]
      %v287 = vld [vmem:[%s4] sm:$0xff]
      %v288 = vld [vmem:[%s4 + $0x8] sm:$0xff]
      %v289 = vld [vmem:[%s4 + $0x10] sm:$0xff]
      %v290 = vld [vmem:[%s4 + $0x18] sm:$0xff]
      %v291 = vld [vmem:[%s4 + $0x20] sm:$0xff]
      %v292 = vld [vmem:[%s4 + $0x28] sm:$0xff]
      %v293 = vld [vmem:[%s4 + $0x30] sm:$0xff]
      %v294 = vld [vmem:[%s4 + $0x38] sm:$0xff]
      %v295 = vld [vmem:[%s4 + $0x40] sm:$0xff]
      %v296 = vld [vmem:[%s4 + $0x48] sm:$0xff]
      %v297 = vld [vmem:[%s4 + $0x50] sm:$0xff]
      %v298 = vld [vmem:[%s4 + $0x58] sm:$0xff]
      %v299 = vld [vmem:[%s4 + $0x60] sm:$0xff]
      %v300 = vld [vmem:[%s4 + $0x68] sm:$0xff]
      %v301 = vld [vmem:[%s4 + $0x70] sm:$0xff]
      %v302 = vld [vmem:[%s4 + $0x78] sm:$0xff]
      %v303 = vld [vmem:[%s216] sm:$0xf]
      %305 = vrot.lane.b32.xlu0 %v303, 1
      %v306 = vpop.permute.xlu0 %305
      %vm308 = vcmask 7168
      %v309 = vsel %vm308, -inf, %v306
      %310 = vrot.lane.b32.xlu0 %v303, 127
      %v311 = vpop.permute.xlu0 %310
      %vm313 = vcmask 121856
      %v314 = vsel %vm313, %v311, -inf
      %v315 = vmax.f32 %v309, %v314
      %v316 = vmax.f32 %v303, %v315
      %v318 = vrot.slane %v316, 4
      %vm320 = vcmask 1043456
      %v321 = vsel %vm320, %v303, %v318
      %v322 = vpack.c.bf16 %v321, %v321
      %324 = vset.pattern.permute.xlu0 0
      %325 = vperm.xlu0 %324, %v239
      %v326 = vpop.permute.xlu0 %325
      %329 = vset.pattern.permute.xlu0 0
      %330 = vperm.xlu0 %329, %v240
      %v331 = vpop.permute.xlu0 %330
      %334 = vset.pattern.permute.xlu0 0
      %335 = vperm.xlu0 %334, %v241
      %v336 = vpop.permute.xlu0 %335
      %339 = vset.pattern.permute.xlu0 0
      %340 = vperm.xlu0 %339, %v242
      %v341 = vpop.permute.xlu0 %340
      %344 = vset.pattern.permute.xlu0 0
      %345 = vperm.xlu0 %344, %v243
      %v346 = vpop.permute.xlu0 %345
      %349 = vset.pattern.permute.xlu0 0
      %350 = vperm.xlu0 %349, %v244
      %v351 = vpop.permute.xlu0 %350
      %354 = vset.pattern.permute.xlu0 0
      %355 = vperm.xlu0 %354, %v245
      %v356 = vpop.permute.xlu0 %355
      %359 = vset.pattern.permute.xlu0 0
      %360 = vperm.xlu0 %359, %v246
      %v361 = vpop.permute.xlu0 %360
      %364 = vset.pattern.permute.xlu0 0
      %365 = vperm.xlu0 %364, %v247
      %v366 = vpop.permute.xlu0 %365
      %369 = vset.pattern.permute.xlu0 0
      %370 = vperm.xlu0 %369, %v248
      %v371 = vpop.permute.xlu0 %370
      %374 = vset.pattern.permute.xlu0 0
      %375 = vperm.xlu0 %374, %v249
      %v376 = vpop.permute.xlu0 %375
      %379 = vset.pattern.permute.xlu0 0
      %380 = vperm.xlu0 %379, %v250
      %v381 = vpop.permute.xlu0 %380
      %384 = vset.pattern.permute.xlu0 0
      %385 = vperm.xlu0 %384, %v251
      %v386 = vpop.permute.xlu0 %385
      %389 = vset.pattern.permute.xlu0 0
      %390 = vperm.xlu0 %389, %v252
      %v391 = vpop.permute.xlu0 %390
      %394 = vset.pattern.permute.xlu0 0
      %395 = vperm.xlu0 %394, %v253
      %v396 = vpop.permute.xlu0 %395
      %399 = vset.pattern.permute.xlu0 0
      %400 = vperm.xlu0 %399, %v254
      %v401 = vpop.permute.xlu0 %400
      %v419 = vunpack.c.l.b16 %v223
      %v420 = vunpack.c.l.b16 %v224
      %v421 = vunpack.c.l.b16 %v225
      %v422 = vunpack.c.l.b16 %v226
      %v423 = vunpack.c.l.b16 %v227
      %v424 = vunpack.c.l.b16 %v228
      %v425 = vunpack.c.l.b16 %v229
      %v426 = vunpack.c.l.b16 %v230
      %v427 = vunpack.c.l.b16 %v231
      %v428 = vunpack.c.l.b16 %v232
      %v429 = vunpack.c.l.b16 %v233
      %v430 = vunpack.c.l.b16 %v234
      %v431 = vunpack.c.l.b16 %v235
      %v432 = vunpack.c.l.b16 %v236
      %v433 = vunpack.c.l.b16 %v237
      %v434 = vunpack.c.l.b16 %v238
      %v435 = vpack.c.b16 %v420, %v419
      %v436 = vpack.c.b16 %v422, %v421
      %v437 = vpack.c.b16 %v424, %v423
      %v438 = vpack.c.b16 %v426, %v425
      %v439 = vpack.c.b16 %v428, %v427
      %v440 = vpack.c.b16 %v430, %v429
      %v441 = vpack.c.b16 %v432, %v431
      %v442 = vpack.c.b16 %v434, %v433
      %vm443 = vcmask 64512
      %v445 = vsel %vm443, %v435, 0
      %v448 = vsel %vm443, %v436, 0
      %v451 = vsel %vm443, %v437, 0
      %v454 = vsel %vm443, %v438, 0
      %v457 = vsel %vm443, %v439, 0
      %v460 = vsel %vm443, %v440, 0
      %v463 = vsel %vm443, %v441, 0
      %v466 = vsel %vm443, %v442, 0
      %v469 = vsel %vm320, %v322, 0
      %471 = vmatprep.subr.bf16.mxu0 0
      %472 = vmatpush1.bf16.msra.mxu0 %v469
      %473 = vmatprep.subr.bf16.mxu0 0
      %474 = vmatpush1.bf16.msra.mxu0 0
      %475 = vmatprep.subr.bf16.mxu0 0
      %476 = vmatpush1.bf16.msra.mxu0 0
      %477 = vmatprep.subr.bf16.mxu0 0
      %478 = vmatpush1.bf16.msra.mxu0 0
      %479 = vmatprep.subr.bf16.mxu0 0
      %480 = vmatpush1.bf16.msra.mxu0 0
      %481 = vmatprep.subr.bf16.mxu0 0
      %482 = vmatpush1.bf16.msra.mxu0 0
      %483 = vmatprep.subr.bf16.mxu0 0
      %484 = vmatpush1.bf16.msra.mxu0 0
      %485 = vmatprep.subr.bf16.mxu0 0
      %486 = vmatpush1.bf16.msra.mxu0 0
      %487 = vmatprep.subr.bf16.mxu0 0
      %488 = vmatpush1.bf16.msra.mxu0 0
      %489 = vmatprep.subr.bf16.mxu0 0
      %490 = vmatpush1.bf16.msra.mxu0 0
      %491 = vmatprep.subr.bf16.mxu0 0
      %492 = vmatpush1.bf16.msra.mxu0 0
      %493 = vmatprep.subr.bf16.mxu0 0
      %494 = vmatpush1.bf16.msra.mxu0 0
      %495 = vmatprep.subr.bf16.mxu0 0
      %496 = vmatpush1.bf16.msra.mxu0 0
      %497 = vmatprep.subr.bf16.mxu0 0
      %498 = vmatpush1.bf16.msra.mxu0 0
      %499 = vmatprep.subr.bf16.mxu0 0
      %500 = vmatpush1.bf16.msra.mxu0 0
      %501 = vmatprep.subr.bf16.mxu0 0
      %502 = vmatpush1.bf16.msra.mxu0 0
      %503 = vmatprep.mubr.bf16.mxu0 0
      %504 = vmatmul.mubr.bf16.gmra.mrb[0].mxu0 %v445
      %v505 = vpop.f32.mrb[0].mxu0
      %v506 = vadd.f32 %v326, %v505
      %v507 = vpop.f32.mrb[0].mxu0
      %v508 = vpop.f32.mrb[0].mxu0
      %v509 = vadd.f32 %v331, %v508
      %v510 = vpop.f32.mrb[0].mxu0
      %511 = vmatprep.mubr.bf16.mxu0 0
      %512 = vmatmul.mubr.bf16.gmra.mrb[0].mxu0 %v448
      %v513 = vpop.f32.mrb[0].mxu0
      %v514 = vadd.f32 %v336, %v513
      %v515 = vpop.f32.mrb[0].mxu0
      %v516 = vpop.f32.mrb[0].mxu0
      %v517 = vadd.f32 %v341, %v516
      %v518 = vpop.f32.mrb[0].mxu0
      %519 = vmatprep.mubr.bf16.mxu0 0
      %520 = vmatmul.mubr.bf16.gmra.mrb[0].mxu0 %v451
      %v521 = vpop.f32.mrb[0].mxu0
      %v522 = vadd.f32 %v346, %v521
      %v523 = vpop.f32.mrb[0].mxu0
      %v524 = vpop.f32.mrb[0].mxu0
      %v525 = vadd.f32 %v351, %v524
      %v526 = vpop.f32.mrb[0].mxu0
      %527 = vmatprep.mubr.bf16.mxu0 0
      %528 = vmatmul.mubr.bf16.gmra.mrb[0].mxu0 %v454
      %v529 = vpop.f32.mrb[0].mxu0
      %v530 = vadd.f32 %v356, %v529
      %v531 = vpop.f32.mrb[0].mxu0
      %v532 = vpop.f32.mrb[0].mxu0
      %v533 = vadd.f32 %v361, %v532
      %v534 = vpop.f32.mrb[0].mxu0
      %535 = vmatprep.mubr.bf16.mxu0 0
      %536 = vmatmul.mubr.bf16.gmra.mrb[0].mxu0 %v457
      %v537 = vpop.f32.mrb[0].mxu0
      %v538 = vadd.f32 %v366, %v537
      %v539 = vpop.f32.mrb[0].mxu0
      %v540 = vpop.f32.mrb[0].mxu0
      %v541 = vadd.f32 %v371, %v540
      %v542 = vpop.f32.mrb[0].mxu0
      %543 = vmatprep.mubr.bf16.mxu0 0
      %544 = vmatmul.mubr.bf16.gmra.mrb[0].mxu0 %v460
      %v545 = vpop.f32.mrb[0].mxu0
      %v546 = vadd.f32 %v376, %v545
      %v547 = vpop.f32.mrb[0].mxu0
      %v548 = vpop.f32.mrb[0].mxu0
      %v549 = vadd.f32 %v381, %v548
      %v550 = vpop.f32.mrb[0].mxu0
      %551 = vmatprep.mubr.bf16.mxu0 0
      %552 = vmatmul.mubr.bf16.gmra.mrb[0].mxu0 %v463
      %v553 = vpop.f32.mrb[0].mxu0
      %v554 = vadd.f32 %v386, %v553
      %v555 = vpop.f32.mrb[0].mxu0
      %v556 = vpop.f32.mrb[0].mxu0
      %v557 = vadd.f32 %v391, %v556
      %v558 = vpop.f32.mrb[0].mxu0
      %559 = vmatprep.mubr.bf16.mxu0 0
      %560 = vmatmul.mubr.bf16.gmra.mrb[0].mxu0 %v466
      %v561 = vpop.f32.mrb[0].mxu0
      %v562 = vadd.f32 %v396, %v561
      %v563 = vpop.f32.mrb[0].mxu0
      %v564 = vpop.f32.mrb[0].mxu0
      %v565 = vadd.f32 %v401, %v564
      %v566 = vpop.f32.mrb[0].mxu0
      %567 = vdwg.mxu0
      %572 = vrot.lane.b32.xlu0 %v522, 1
      %v573 = vpop.permute.xlu0 %572
      %574 = vrot.lane.b32.xlu0 %v525, 1
      %v575 = vpop.permute.xlu0 %574
      %576 = vrot.lane.b32.xlu0 %v530, 1
      %v577 = vpop.permute.xlu0 %576
      %578 = vrot.lane.b32.xlu0 %v533, 1
      %v579 = vpop.permute.xlu0 %578
      %v584 = vsel %vm308, 0.0, %v573
      %v585 = vsel %vm308, 0.0, %v575
      %v586 = vsel %vm308, 0.0, %v577
      %v587 = vsel %vm308, 0.0, %v579
      %588 = vrot.lane.b32.xlu0 %v522, 127
      %v589 = vpop.permute.xlu0 %588
      %590 = vrot.lane.b32.xlu0 %v525, 127
      %v591 = vpop.permute.xlu0 %590
      %592 = vrot.lane.b32.xlu0 %v530, 127
      %v593 = vpop.permute.xlu0 %592
      %594 = vrot.lane.b32.xlu0 %v533, 127
      %v595 = vpop.permute.xlu0 %594
      %v600 = vsel %vm313, %v589, 0.0
      %v601 = vsel %vm313, %v591, 0.0
      %v602 = vsel %vm313, %v593, 0.0
      %v603 = vsel %vm313, %v595, 0.0
      %608 = vrot.lane.b32.xlu0 %v538, 2
      %v609 = vpop.permute.xlu0 %608
      %610 = vrot.lane.b32.xlu0 %v541, 2
      %v611 = vpop.permute.xlu0 %610
      %612 = vrot.lane.b32.xlu0 %v546, 2
      %v613 = vpop.permute.xlu0 %612
      %614 = vrot.lane.b32.xlu0 %v549, 2
      %v615 = vpop.permute.xlu0 %614
      %vm620 = vcmask 15360
      %v621 = vsel %vm620, 0.0, %v609
      %v622 = vsel %vm620, 0.0, %v611
      %v623 = vsel %vm620, 0.0, %v613
      %v624 = vsel %vm620, 0.0, %v615
      %625 = vrot.lane.b32.xlu0 %v538, 1
      %v626 = vpop.permute.xlu0 %625
      %627 = vrot.lane.b32.xlu0 %v541, 1
      %v628 = vpop.permute.xlu0 %627
      %629 = vrot.lane.b32.xlu0 %v546, 1
      %v630 = vpop.permute.xlu0 %629
      %631 = vrot.lane.b32.xlu0 %v549, 1
      %v632 = vpop.permute.xlu0 %631
      %v637 = vsel %vm308, 0.0, %v626
      %v638 = vsel %vm308, 0.0, %v628
      %v639 = vsel %vm308, 0.0, %v630
      %v640 = vsel %vm308, 0.0, %v632
      %641 = vrot.lane.b32.xlu0 %v538, 127
      %v642 = vpop.permute.xlu0 %641
      %643 = vrot.lane.b32.xlu0 %v541, 127
      %v644 = vpop.permute.xlu0 %643
      %645 = vrot.lane.b32.xlu0 %v546, 127
      %v646 = vpop.permute.xlu0 %645
      %647 = vrot.lane.b32.xlu0 %v549, 127
      %v648 = vpop.permute.xlu0 %647
      %v653 = vsel %vm313, %v642, 0.0
      %v654 = vsel %vm313, %v644, 0.0
      %v655 = vsel %vm313, %v646, 0.0
      %v656 = vsel %vm313, %v648, 0.0
      %657 = vrot.lane.b32.xlu0 %v538, 126
      %v658 = vpop.permute.xlu0 %657
      %659 = vrot.lane.b32.xlu0 %v541, 126
      %v660 = vpop.permute.xlu0 %659
      %661 = vrot.lane.b32.xlu0 %v546, 126
      %v662 = vpop.permute.xlu0 %661
      %663 = vrot.lane.b32.xlu0 %v549, 126
      %v664 = vpop.permute.xlu0 %663
      %vm669 = vcmask 113664
      %v670 = vsel %vm669, %v658, 0.0
      %v671 = vsel %vm669, %v660, 0.0
      %v672 = vsel %vm669, %v662, 0.0
      %v673 = vsel %vm669, %v664, 0.0
      %v674 = vpack.c.bf16 %v509, %v506
      %v675 = vpack.c.bf16 %v517, %v514
      %v676 = vpack.c.bf16 %v585, %v584
      %v677 = vpack.c.bf16 %v587, %v586
      %v678 = vpack.c.bf16 %v525, %v522
      %v679 = vpack.c.bf16 %v533, %v530
      %v680 = vpack.c.bf16 %v601, %v600
      %v681 = vpack.c.bf16 %v603, %v602
      %v682 = vpack.c.bf16 %v622, %v621
      %v683 = vpack.c.bf16 %v624, %v623
      %v684 = vpack.c.bf16 %v638, %v637
      %v685 = vpack.c.bf16 %v640, %v639
      %v686 = vpack.c.bf16 %v541, %v538
      %v687 = vpack.c.bf16 %v549, %v546
      %v688 = vpack.c.bf16 %v654, %v653
      %v689 = vpack.c.bf16 %v656, %v655
      %v690 = vpack.c.bf16 %v671, %v670
      %v691 = vpack.c.bf16 %v673, %v672
      %v692 = vpack.c.bf16 %v557, %v554
      %v693 = vpack.c.bf16 %v565, %v562
      %695 = vset.pattern.permute.xlu0 0
      %696 = vperm.xlu0 %695, %v287
      %v697 = vpop.permute.xlu0 %696
      %700 = vset.pattern.permute.xlu0 0
      %701 = vperm.xlu0 %700, %v288
      %v702 = vpop.permute.xlu0 %701
      %705 = vset.pattern.permute.xlu0 0
      %706 = vperm.xlu0 %705, %v289
      %v707 = vpop.permute.xlu0 %706
      %710 = vset.pattern.permute.xlu0 0
      %711 = vperm.xlu0 %710, %v290
      %v712 = vpop.permute.xlu0 %711
      %715 = vset.pattern.permute.xlu0 0
      %716 = vperm.xlu0 %715, %v291
      %v717 = vpop.permute.xlu0 %716
      %720 = vset.pattern.permute.xlu0 0
      %721 = vperm.xlu0 %720, %v292
      %v722 = vpop.permute.xlu0 %721
      %725 = vset.pattern.permute.xlu0 0
      %726 = vperm.xlu0 %725, %v293
      %v727 = vpop.permute.xlu0 %726
      %730 = vset.pattern.permute.xlu0 0
      %731 = vperm.xlu0 %730, %v294
      %v732 = vpop.permute.xlu0 %731
      %735 = vset.pattern.permute.xlu0 0
      %736 = vperm.xlu0 %735, %v295
      %v737 = vpop.permute.xlu0 %736
      %740 = vset.pattern.permute.xlu0 0
      %741 = vperm.xlu0 %740, %v296
      %v742 = vpop.permute.xlu0 %741
      %745 = vset.pattern.permute.xlu0 0
      %746 = vperm.xlu0 %745, %v297
      %v747 = vpop.permute.xlu0 %746
      %750 = vset.pattern.permute.xlu0 0
      %751 = vperm.xlu0 %750, %v298
      %v752 = vpop.permute.xlu0 %751
      %755 = vset.pattern.permute.xlu0 0
      %756 = vperm.xlu0 %755, %v299
      %v757 = vpop.permute.xlu0 %756
      %760 = vset.pattern.permute.xlu0 0
      %761 = vperm.xlu0 %760, %v300
      %v762 = vpop.permute.xlu0 %761
      %765 = vset.pattern.permute.xlu0 0
      %766 = vperm.xlu0 %765, %v301
      %v767 = vpop.permute.xlu0 %766
      %770 = vset.pattern.permute.xlu0 0
      %771 = vperm.xlu0 %770, %v302
      %v772 = vpop.permute.xlu0 %771
      %v806 = vunpack.c.l.b16 %v255
      %v807 = vunpack.c.h.b16 %v255
      %v808 = vunpack.c.l.b16 %v256
      %v809 = vunpack.c.l.b16 %v257
      %v810 = vunpack.c.h.b16 %v257
      %v811 = vunpack.c.l.b16 %v258
      %v812 = vunpack.c.l.b16 %v259
      %v813 = vunpack.c.h.b16 %v259
      %v814 = vunpack.c.l.b16 %v260
      %v815 = vunpack.c.l.b16 %v261
      %v816 = vunpack.c.h.b16 %v261
      %v817 = vunpack.c.l.b16 %v262
      %v818 = vunpack.c.l.b16 %v263
      %v819 = vunpack.c.h.b16 %v263
      %v820 = vunpack.c.l.b16 %v264
      %v821 = vunpack.c.l.b16 %v265
      %v822 = vunpack.c.h.b16 %v265
      %v823 = vunpack.c.l.b16 %v266
      %v824 = vunpack.c.l.b16 %v267
      %v825 = vunpack.c.h.b16 %v267
      %v826 = vunpack.c.l.b16 %v268
      %v827 = vunpack.c.l.b16 %v269
      %v828 = vunpack.c.h.b16 %v269
      %v829 = vunpack.c.l.b16 %v270
      %v830 = vunpack.c.l.b16 %v271
      %v831 = vunpack.c.h.b16 %v271
      %v832 = vunpack.c.l.b16 %v272
      %v833 = vunpack.c.l.b16 %v273
      %v834 = vunpack.c.h.b16 %v273
      %v835 = vunpack.c.l.b16 %v274
      %v836 = vunpack.c.l.b16 %v275
      %v837 = vunpack.c.h.b16 %v275
      %v838 = vunpack.c.l.b16 %v276
      %v839 = vunpack.c.l.b16 %v277
      %v840 = vunpack.c.h.b16 %v277
      %v841 = vunpack.c.l.b16 %v278
      %v842 = vunpack.c.l.b16 %v279
      %v843 = vunpack.c.h.b16 %v279
      %v844 = vunpack.c.l.b16 %v280
      %v845 = vunpack.c.l.b16 %v281
      %v846 = vunpack.c.h.b16 %v281
      %v847 = vunpack.c.l.b16 %v282
      %v848 = vunpack.c.l.b16 %v283
      %v849 = vunpack.c.h.b16 %v283
      %v850 = vunpack.c.l.b16 %v284
      %v851 = vunpack.c.l.b16 %v285
      %v852 = vunpack.c.h.b16 %v285
      %v853 = vunpack.c.l.b16 %v286
      %v854 = vpack.c.b16 %v809, %v806
      %v855 = vpack.c.b16 %v810, %v807
      %v856 = vpack.c.b16 %v811, %v808
      %v857 = vpack.c.b16 %v815, %v812
      %v858 = vpack.c.b16 %v816, %v813
      %v859 = vpack.c.b16 %v817, %v814
      %v860 = vpack.c.b16 %v821, %v818
      %v861 = vpack.c.b16 %v822, %v819
      %v862 = vpack.c.b16 %v823, %v820
      %v863 = vpack.c.b16 %v827, %v824
      %v864 = vpack.c.b16 %v828, %v825
      %v865 = vpack.c.b16 %v829, %v826
      %v866 = vpack.c.b16 %v833, %v830
      %v867 = vpack.c.b16 %v834, %v831
      %v868 = vpack.c.b16 %v835, %v832
      %v869 = vpack.c.b16 %v839, %v836
      %v870 = vpack.c.b16 %v840, %v837
      %v871 = vpack.c.b16 %v841, %v838
      %v872 = vpack.c.b16 %v845, %v842
      %v873 = vpack.c.b16 %v846, %v843
      %v874 = vpack.c.b16 %v847, %v844
      %v875 = vpack.c.b16 %v851, %v848
      %v876 = vpack.c.b16 %v852, %v849
      %v877 = vpack.c.b16 %v853, %v850
      %vm894 = vcmask 523264
      %v896 = vsel %vm894, %v856, 0
      %v899 = vsel %vm894, %v859, 0
      %v902 = vsel %vm894, %v862, 0
      %v905 = vsel %vm894, %v865, 0
      %v908 = vsel %vm894, %v868, 0
      %v911 = vsel %vm894, %v871, 0
      %v914 = vsel %vm894, %v874, 0
      %v917 = vsel %vm894, %v877, 0
      %919 = vmatprep.subr.bf16.mxu0 0
      %920 = vmatpush1.bf16.msra.mxu0 %v674
      %921 = vmatprep.subr.bf16.mxu0 0
      %922 = vmatpush1.bf16.msra.mxu0 %v675
      %923 = vmatprep.subr.bf16.mxu0 0
      %924 = vmatpush1.bf16.msra.mxu0 %v676
      %925 = vmatprep.subr.bf16.mxu0 0
      %926 = vmatpush1.bf16.msra.mxu0 %v677
      %927 = vmatprep.subr.bf16.mxu0 0
      %928 = vmatpush1.bf16.msra.mxu0 %v678
      %929 = vmatprep.subr.bf16.mxu0 0
      %930 = vmatpush1.bf16.msra.mxu0 %v679
      %931 = vmatprep.subr.bf16.mxu0 0
      %932 = vmatpush1.bf16.msra.mxu0 %v680
      %933 = vmatprep.subr.bf16.mxu0 0
      %934 = vmatpush1.bf16.msra.mxu0 %v681
      %935 = vmatprep.subr.bf16.mxu0 0
      %936 = vmatpush1.bf16.msra.mxu0 %v682
      %937 = vmatprep.subr.bf16.mxu0 0
      %938 = vmatpush1.bf16.msra.mxu0 %v683
      %939 = vmatprep.subr.bf16.mxu0 0
      %940 = vmatpush1.bf16.msra.mxu0 %v684
      %941 = vmatprep.subr.bf16.mxu0 0
      %942 = vmatpush1.bf16.msra.mxu0 %v685
      %943 = vmatprep.subr.bf16.mxu0 0
      %944 = vmatpush1.bf16.msra.mxu0 %v686
      %945 = vmatprep.subr.bf16.mxu0 0
      %946 = vmatpush1.bf16.msra.mxu0 %v687
      %947 = vmatprep.subr.bf16.mxu0 0
      %948 = vmatpush1.bf16.msra.mxu0 %v688
      %949 = vmatprep.subr.bf16.mxu0 0
      %950 = vmatpush1.bf16.msra.mxu0 %v689
      %951 = vmatprep.mubr.bf16.mxu0 %v855
      %952 = vmatmul.mubr.bf16.gmra.mrb[0].mxu0 %v854
      %v953 = vpop.f32.mrb[0].mxu0
      %v954 = vadd.f32 %v697, %v953
      %v955 = vpop.f32.mrb[0].mxu0
      %v956 = vpop.f32.mrb[0].mxu0
      %v957 = vadd.f32 %v702, %v956
      %v958 = vpop.f32.mrb[0].mxu0
      %959 = vmatprep.mubr.bf16.mxu0 %v858
      %960 = vmatmul.mubr.bf16.gmra.mrb[0].mxu0 %v857
      %v961 = vpop.f32.mrb[0].mxu0
      %v962 = vadd.f32 %v707, %v961
      %v963 = vpop.f32.mrb[0].mxu0
      %v964 = vpop.f32.mrb[0].mxu0
      %v965 = vadd.f32 %v712, %v964
      %v966 = vpop.f32.mrb[0].mxu0
      %967 = vmatprep.mubr.bf16.mxu0 %v861
      %968 = vmatmul.mubr.bf16.gmra.mrb[0].mxu0 %v860
      %v969 = vpop.f32.mrb[0].mxu0
      %v970 = vadd.f32 %v717, %v969
      %v971 = vpop.f32.mrb[0].mxu0
      %v972 = vpop.f32.mrb[0].mxu0
      %v973 = vadd.f32 %v722, %v972
      %v974 = vpop.f32.mrb[0].mxu0
      %975 = vmatprep.mubr.bf16.mxu0 %v864
      %976 = vmatmul.mubr.bf16.gmra.mrb[0].mxu0 %v863
      %v977 = vpop.f32.mrb[0].mxu0
      %v978 = vadd.f32 %v727, %v977
      %v979 = vpop.f32.mrb[0].mxu0
      %v980 = vpop.f32.mrb[0].mxu0
      %v981 = vadd.f32 %v732, %v980
      %v982 = vpop.f32.mrb[0].mxu0
      %983 = vmatprep.mubr.bf16.mxu0 %v867
      %984 = vmatmul.mubr.bf16.gmra.mrb[0].mxu0 %v866
      %v985 = vpop.f32.mrb[0].mxu0
      %v986 = vadd.f32 %v737, %v985
      %v987 = vpop.f32.mrb[0].mxu0
      %v988 = vpop.f32.mrb[0].mxu0
      %v989 = vadd.f32 %v742, %v988
      %v990 = vpop.f32.mrb[0].mxu0
      %991 = vmatprep.mubr.bf16.mxu0 %v870
      %992 = vmatmul.mubr.bf16.gmra.mrb[0].mxu0 %v869
      %v993 = vpop.f32.mrb[0].mxu0
      %v994 = vadd.f32 %v747, %v993
      %v995 = vpop.f32.mrb[0].mxu0
      %v996 = vpop.f32.mrb[0].mxu0
      %v997 = vadd.f32 %v752, %v996
      %v998 = vpop.f32.mrb[0].mxu0
      %999 = vmatprep.mubr.bf16.mxu0 %v873
      %1000 = vmatmul.mubr.bf16.gmra.mrb[0].mxu0 %v872
      %v1001 = vpop.f32.mrb[0].mxu0
      %v1002 = vadd.f32 %v757, %v1001
      %v1003 = vpop.f32.mrb[0].mxu0
      %v1004 = vpop.f32.mrb[0].mxu0
      %v1005 = vadd.f32 %v762, %v1004
      %v1006 = vpop.f32.mrb[0].mxu0
      %1007 = vmatprep.mubr.bf16.mxu0 %v876
      %1008 = vmatmul.mubr.bf16.gmra.mrb[0].mxu0 %v875
      %v1009 = vpop.f32.mrb[0].mxu0
      %v1010 = vadd.f32 %v767, %v1009
      %v1011 = vpop.f32.mrb[0].mxu0
      %v1012 = vpop.f32.mrb[0].mxu0
      %v1013 = vadd.f32 %v772, %v1012
      %v1014 = vpop.f32.mrb[0].mxu0
      %1015 = vdwg.mxu0
      %1016 = vmatprep.subr.bf16.mxu0 0
      %1017 = vmatpush1.bf16.msra.mxu0 %v690
      %1018 = vmatprep.subr.bf16.mxu0 0
      %1019 = vmatpush1.bf16.msra.mxu0 %v691
      %1020 = vmatprep.subr.bf16.mxu0 0
      %1021 = vmatpush1.bf16.msra.mxu0 %v692
      %1022 = vmatprep.subr.bf16.mxu0 0
      %1023 = vmatpush1.bf16.msra.mxu0 %v693
      %1024 = vmatprep.subr.bf16.mxu0 0
      %1025 = vmatpush1.bf16.msra.mxu0 0
      %1026 = vmatprep.subr.bf16.mxu0 0
      %1027 = vmatpush1.bf16.msra.mxu0 0
      %1028 = vmatprep.subr.bf16.mxu0 0
      %1029 = vmatpush1.bf16.msra.mxu0 0
      %1030 = vmatprep.subr.bf16.mxu0 0
      %1031 = vmatpush1.bf16.msra.mxu0 0
      %1032 = vmatprep.subr.bf16.mxu0 0
      %1033 = vmatpush1.bf16.msra.mxu0 0
      %1034 = vmatprep.subr.bf16.mxu0 0
      %1035 = vmatpush1.bf16.msra.mxu0 0
      %1036 = vmatprep.subr.bf16.mxu0 0
      %1037 = vmatpush1.bf16.msra.mxu0 0
      %1038 = vmatprep.subr.bf16.mxu0 0
      %1039 = vmatpush1.bf16.msra.mxu0 0
      %1040 = vmatprep.subr.bf16.mxu0 0
      %1041 = vmatpush1.bf16.msra.mxu0 0
      %1042 = vmatprep.subr.bf16.mxu0 0
      %1043 = vmatpush1.bf16.msra.mxu0 0
      %1044 = vmatprep.subr.bf16.mxu0 0
      %1045 = vmatpush1.bf16.msra.mxu0 0
      %1046 = vmatprep.subr.bf16.mxu0 0
      %1047 = vmatpush1.bf16.msra.mxu0 0
      %1048 = vmatprep.mubr.bf16.mxu0 0
      %1049 = vmatmul.mubr.bf16.gmra.mrb[0].mxu0 %v896
      %v1050 = vpop.f32.mrb[0].mxu0
      %v1051 = vadd.f32 %v954, %v1050
      %v1052 = vpop.f32.mrb[0].mxu0
      %v1053 = vpop.f32.mrb[0].mxu0
      %v1054 = vadd.f32 %v957, %v1053
      %v1055 = vpop.f32.mrb[0].mxu0
      %1056 = vmatprep.mubr.bf16.mxu0 0
      %1057 = vmatmul.mubr.bf16.gmra.mrb[0].mxu0 %v899
      %v1058 = vpop.f32.mrb[0].mxu0
      %v1059 = vadd.f32 %v962, %v1058
      %v1060 = vpop.f32.mrb[0].mxu0
      %v1061 = vpop.f32.mrb[0].mxu0
      %v1062 = vadd.f32 %v965, %v1061
      %v1063 = vpop.f32.mrb[0].mxu0
      %1064 = vmatprep.mubr.bf16.mxu0 0
      %1065 = vmatmul.mubr.bf16.gmra.mrb[0].mxu0 %v902
      %v1066 = vpop.f32.mrb[0].mxu0
      %v1067 = vadd.f32 %v970, %v1066
      %v1068 = vpop.f32.mrb[0].mxu0
      %v1069 = vpop.f32.mrb[0].mxu0
      %v1070 = vadd.f32 %v973, %v1069
      %v1071 = vpop.f32.mrb[0].mxu0
      %1072 = vmatprep.mubr.bf16.mxu0 0
      %1073 = vmatmul.mubr.bf16.gmra.mrb[0].mxu0 %v905
      %v1074 = vpop.f32.mrb[0].mxu0
      %v1075 = vadd.f32 %v978, %v1074
      %v1076 = vpop.f32.mrb[0].mxu0
      %v1077 = vpop.f32.mrb[0].mxu0
      %v1078 = vadd.f32 %v981, %v1077
      %v1079 = vpop.f32.mrb[0].mxu0
      %1080 = vmatprep.mubr.bf16.mxu0 0
      %1081 = vmatmul.mubr.bf16.gmra.mrb[0].mxu0 %v908
      %v1082 = vpop.f32.mrb[0].mxu0
      %v1083 = vadd.f32 %v986, %v1082
      %v1084 = vpop.f32.mrb[0].mxu0
      %v1085 = vpop.f32.mrb[0].mxu0
      %v1086 = vadd.f32 %v989, %v1085
      %v1087 = vpop.f32.mrb[0].mxu0
      %1088 = vmatprep.mubr.bf16.mxu0 0
      %1089 = vmatmul.mubr.bf16.gmra.mrb[0].mxu0 %v911
      %v1090 = vpop.f32.mrb[0].mxu0
      %v1091 = vadd.f32 %v994, %v1090
      %v1092 = vpop.f32.mrb[0].mxu0
      %v1093 = vpop.f32.mrb[0].mxu0
      %v1094 = vadd.f32 %v997, %v1093
      %v1095 = vpop.f32.mrb[0].mxu0
      %1096 = vmatprep.mubr.bf16.mxu0 0
      %1097 = vmatmul.mubr.bf16.gmra.mrb[0].mxu0 %v914
      %v1098 = vpop.f32.mrb[0].mxu0
      %v1099 = vadd.f32 %v1002, %v1098
      %v1100 = vpop.f32.mrb[0].mxu0
      %v1101 = vpop.f32.mrb[0].mxu0
      %v1102 = vadd.f32 %v1005, %v1101
      %v1103 = vpop.f32.mrb[0].mxu0
      %1104 = vmatprep.mubr.bf16.mxu0 0
      %1105 = vmatmul.mubr.bf16.gmra.mrb[0].mxu0 %v917
      %v1106 = vpop.f32.mrb[0].mxu0
      %v1107 = vadd.f32 %v1010, %v1106
      %v1108 = vpop.f32.mrb[0].mxu0
      %v1109 = vpop.f32.mrb[0].mxu0
      %v1110 = vadd.f32 %v1013, %v1109
      %v1111 = vpop.f32.mrb[0].mxu0
      %1112 = vdwg.mxu0
      %v1113 = vmax.f32 %v1051, 0.0
      %v1114 = vmax.f32 %v1054, 0.0
      %v1115 = vmax.f32 %v1059, 0.0
      %v1116 = vmax.f32 %v1062, 0.0
      %v1117 = vmax.f32 %v1067, 0.0
      %v1118 = vmax.f32 %v1070, 0.0
      %v1119 = vmax.f32 %v1075, 0.0
      %v1120 = vmax.f32 %v1078, 0.0
      %v1121 = vmax.f32 %v1083, 0.0
      %v1122 = vmax.f32 %v1086, 0.0
      %v1123 = vmax.f32 %v1091, 0.0
      %v1124 = vmax.f32 %v1094, 0.0
      %v1125 = vmax.f32 %v1099, 0.0
      %v1126 = vmax.f32 %v1102, 0.0
      %v1127 = vmax.f32 %v1107, 0.0
      %v1128 = vmax.f32 %v1110, 0.0
      %vm1129 = vcmask 130048
      %1130 = vst.msk [vmem:[%s221] sm:$0xff] %vm1129, %v1113
      %1131 = vst.msk [vmem:[%s221 + $0x8] sm:$0xff] %vm1129, %v1114
      %1132 = vst.msk [vmem:[%s221 + $0x10] sm:$0xff] %vm1129, %v1115
      %1133 = vst.msk [vmem:[%s221 + $0x18] sm:$0xff] %vm1129, %v1116
      %1134 = vst.msk [vmem:[%s221 + $0x20] sm:$0xff] %vm1129, %v1117
      %1135 = vst.msk [vmem:[%s221 + $0x28] sm:$0xff] %vm1129, %v1118
      %1136 = vst.msk [vmem:[%s221 + $0x30] sm:$0xff] %vm1129, %v1119
      %1137 = vst.msk [vmem:[%s221 + $0x38] sm:$0xff] %vm1129, %v1120
      %1138 = vst.msk [vmem:[%s221 + $0x40] sm:$0xff] %vm1129, %v1121
      %1139 = vst.msk [vmem:[%s221 + $0x48] sm:$0xff] %vm1129, %v1122
      %1140 = vst.msk [vmem:[%s221 + $0x50] sm:$0xff] %vm1129, %v1123
      %1141 = vst.msk [vmem:[%s221 + $0x58] sm:$0xff] %vm1129, %v1124
      %1142 = vst.msk [vmem:[%s221 + $0x60] sm:$0xff] %vm1129, %v1125
      %1143 = vst.msk [vmem:[%s221 + $0x68] sm:$0xff] %vm1129, %v1126
      %1144 = vst.msk [vmem:[%s221 + $0x70] sm:$0xff] %vm1129, %v1127
      %1145 = vst.msk [vmem:[%s221 + $0x78] sm:$0xff] %vm1129, %v1128
      %p1146 = scmp.lt.s32.totalorder %s16, 1
      %s1147 = scalar_select %p1146, %s16, 1
      %s1148 = smul.addr %s1147, 16
      %s1149 = smul.addr %s1148, 8
      %s1150 = scalar_lea.vmem %s5, %s1149
      // Predicated region
      $region41: #{inception1d_pallas.1} parent=39 // pred_check
        %p1151 = pneg %p144
      $region42: #{inception1d_pallas.1} parent=39 // pred_check_branch
        %1153 = sbr.rel (%p1151) target = $region44
      $region43: #{inception1d_pallas.1} parent=39 // pred_region
        _
      $region44: #{inception1d_pallas.1} parent=39 // pred_fallthru
        _
    $region40: #{inception1d_pallas.1} parent=5 // pred_fallthru
      _
    %p1154 = scmp.le.s32.totalorder 2, %s11
    // Predicated region
    $region45: #{inception1d_pallas.1} parent=5 // pred_check
      %p1155 = pneg %p1154
    $region46: #{inception1d_pallas.1} parent=5 // pred_check_branch
      %1157 = sbr.rel (%p1155) target = $region48
    $region47: #{inception1d_pallas.1} parent=5 // pred_region
      %s1158 = ssub.s32 %s11, 2
      // Predicated region
      $region49: #{inception1d_pallas.1} parent=47 // pred_check
        %p1159 = pneg %p150
      $region50: #{inception1d_pallas.1} parent=47 // pred_check_branch
        %1161 = sbr.rel (%p1159) target = $region52
      $region51: #{inception1d_pallas.1} parent=47 // pred_region
        %p1162 = scmp.lt.s32.totalorder %s17, 1
        %s1163 = scalar_select %p1162, %s17, 1
        %s1164 = smul.addr %s1163, 16
        %s1165 = smul.addr %s1164, 8
        %s1166 = scalar_lea.vmem %s5, %s1165
      $region52: #{inception1d_pallas.1} parent=47 // pred_fallthru
        _
    $region48: #{inception1d_pallas.1} parent=5 // pred_fallthru
      _
  $region6: #{inception1d_pallas.1} parent=0 // loop_footer
    %s15 = sadd.s32 1, %s11
  $region7: #{inception1d_pallas.1} parent=0 // loop_footer_branch
    %10 = sbr.rel target = $region3
  $region8: #{inception1d_pallas.1} parent=0 // loop_exit
    _

</llo_original>
